<compile_context>
chip_gen: v5e
topology: v5e:2x2
jax: 0.10.0
libtpu: 0.0.40
codegen_flags: <defaults>
</compile_context>

<pallas_src>
import jax
import jax.numpy as jnp
from jax.experimental import pallas as pl
from jax.experimental.pallas import tpu as pltpu


def conv_bn_silu_kernel(x_ref, w_ref, scale_ref, shift_ref, o_ref):
    # x_ref:     (Cin, tn)   spatial tile, channels on sublanes, spatial on lanes
    # w_ref:     (Cout, Cin) 1x1 conv weight as a matrix
    # scale_ref: (Cout, 1)   folded BN scale = gamma / sqrt(var + eps)   (f32)
    # shift_ref: (Cout, 1)   folded BN shift = beta - mean * scale       (f32)
    # o_ref:     (Cout, tn)  lane-dense output tile
    y = jnp.dot(w_ref[...], x_ref[...], preferred_element_type=jnp.float32)
    y = y * scale_ref[...] + shift_ref[...]           # BN affine (f32)
    o_ref[...] = (y * jax.nn.sigmoid(y)).astype(o_ref.dtype)  # SiLU (f32 math)


def conv_forward(x_nchw, weight, gamma, beta, running_mean, running_var,
                 eps=1e-3, tn=1024, compute_dtype=jnp.bfloat16):
    """Forward of Conv(in_ch, out_ch, k=1): SiLU(BN(Conv2d_1x1(x))), NCHW in/out."""
    N, Cin, H, W = x_nchw.shape
    Cout = weight.shape[0]
    HW = H * W

    # Fold BatchNorm into a per-output-channel affine (plain-JAX glue, f32).
    scale = (gamma.astype(jnp.float32)
             / jnp.sqrt(running_var.astype(jnp.float32) + eps))
    shift = beta.astype(jnp.float32) - running_mean.astype(jnp.float32) * scale

    # NCHW -> (N, Cin, H*W): a pure reshape, no data movement.
    x3d = x_nchw.reshape(N, Cin, HW).astype(compute_dtype)
    w2d = weight.reshape(Cout, Cin).astype(compute_dtype)

    # Spatial (lane) tiling: pad H*W up to a multiple of the tile so the grid
    # covers it exactly and every store is an unmasked, lane-dense vst.
    hw_lane = ((HW + 127) // 128) * 128          # lane alignment (128)
    tn_eff = min(tn, hw_lane)
    hw_pad = ((hw_lane + tn_eff - 1) // tn_eff) * tn_eff
    if hw_pad != HW:
        x3d = jnp.pad(x3d, ((0, 0), (0, 0), (0, hw_pad - HW)))

    grid = (N, hw_pad // tn_eff)

    # Explicit VMEM budget: double-buffered x/out tiles + resident weight/affine.
    in_elem = jnp.dtype(compute_dtype).itemsize
    out_elem = jnp.dtype(x_nchw.dtype).itemsize
    tile_bytes = 2 * (Cin * tn_eff * in_elem + Cout * tn_eff * out_elem)
    const_bytes = 2 * (Cout * Cin * in_elem + 2 * Cout * 128 * 4)
    vmem_limit = int(min(max(tile_bytes + const_bytes + (8 << 20), 32 << 20),
                         64 << 20))  # stay within v7x's 64 MiB physical VMEM

    out3d = pl.pallas_call(
        conv_bn_silu_kernel,
        out_shape=jax.ShapeDtypeStruct((N, Cout, hw_pad), x_nchw.dtype),
        grid_spec=pltpu.PrefetchScalarGridSpec(
            num_scalar_prefetch=0,
            grid=grid,
            in_specs=[
                # batch dim squeezed out of the kernel view
                pl.BlockSpec((None, Cin, tn_eff), lambda b, j: (b, 0, j)),
                pl.BlockSpec((Cout, Cin), lambda b, j: (0, 0)),
                pl.BlockSpec((Cout, 1), lambda b, j: (0, 0)),
                pl.BlockSpec((Cout, 1), lambda b, j: (0, 0)),
            ],
            out_specs=pl.BlockSpec((None, Cout, tn_eff), lambda b, j: (b, 0, j)),
        ),
        compiler_params=pltpu.CompilerParams(
            dimension_semantics=("parallel", "parallel"),
            vmem_limit_bytes=vmem_limit,
        ),
    )(x3d, w2d, scale.reshape(Cout, 1), shift.reshape(Cout, 1))

    if hw_pad != HW:
        out3d = out3d[:, :, :HW]
    return out3d.reshape(N, Cout, H, W)


def _reference(x, weight, gamma, beta, mean, var, eps=1e-3):
    # Pure-JAX reference for the same (eval-mode) forward.
    y = jax.lax.conv_general_dilated(
        x, weight, window_strides=(1, 1), padding="VALID",
        dimension_numbers=("NCHW", "OIHW", "NCHW"))
    y = (y - mean[None, :, None, None]) / jnp.sqrt(var[None, :, None, None] + eps)
    y = y * gamma[None, :, None, None] + beta[None, :, None, None]
    return y * jax.nn.sigmoid(y)


if __name__ == "__main__":
    key = jax.random.PRNGKey(0)
    k_x, k_w, k_g, k_b, k_m, k_v = jax.random.split(key, 6)

    N, Cin, Cout, H, W = 2, 16, 8, 16, 16
    x = jax.random.normal(k_x, (N, Cin, H, W), dtype=jnp.float32)

    # Deterministic synthetic parameters (shapes from the module __init__).
    weight = jax.random.normal(k_w, (Cout, Cin, 1, 1), dtype=jnp.float32) * 0.1
    gamma = 1.0 + 0.1 * jax.random.normal(k_g, (Cout,), dtype=jnp.float32)
    beta = 0.1 * jax.random.normal(k_b, (Cout,), dtype=jnp.float32)
    running_mean = 0.1 * jax.random.normal(k_m, (Cout,), dtype=jnp.float32)
    running_var = jnp.abs(jax.random.normal(k_v, (Cout,), dtype=jnp.float32)) + 0.5

    out = conv_forward(x, weight, gamma, beta, running_mean, running_var)
    out = jax.block_until_ready(out)

    ref = _reference(x, weight, gamma, beta, running_mean, running_var)
    assert out.shape == (N, Cout, H, W)
    # bf16 MXU operands -> relaxed tolerance vs the f32 reference.
    assert jnp.allclose(out, ref, atol=3e-2, rtol=3e-2), "mismatch vs reference"

    print("KERNEL_OK")
</pallas_src>

<mosaic_0001>
module attributes {stable_mosaic.version = 11 : i64} {
  func.func @conv_bn_silu_kernel(%arg0: i32, %arg1: i32, %arg2: memref<1x16x256xbf16, #tpu.memory_space<vmem>>, %arg3: memref<8x16xbf16, #tpu.memory_space<vmem>>, %arg4: memref<8x1xf32, #tpu.memory_space<vmem>>, %arg5: memref<8x1xf32, #tpu.memory_space<vmem>>, %arg6: memref<1x8x256xf32, #tpu.memory_space<vmem>>) attributes {dimension_semantics = [#tpu.dimension_semantics<parallel>, #tpu.dimension_semantics<parallel>], iteration_bounds = array<i64: 2, 1>, scalar_prefetch = 0 : i64, scratch_operands = 0 : i64, tpu.core_type = #tpu.core_type<tc>, window_params = [{transform_indices = @transform_0, window_bounds = array<i64: 1, 16, 256>}, {pipeline_mode = #tpu.pipeline_mode<synchronous>, transform_indices = @transform_1, window_bounds = array<i64: 8, 16>}, {pipeline_mode = #tpu.pipeline_mode<synchronous>, transform_indices = @transform_2, window_bounds = array<i64: 8, 1>}, {pipeline_mode = #tpu.pipeline_mode<synchronous>, transform_indices = @transform_3, window_bounds = array<i64: 8, 1>}, {transform_indices = @transform_4, window_bounds = array<i64: 1, 8, 256>}]} {
    %c0 = arith.constant 0 : index
    %c0_0 = arith.constant 0 : index
    %0 = vector.load %arg3[%c0, %c0_0] : memref<8x16xbf16, #tpu.memory_space<vmem>>, vector<8x16xbf16>
    %c0_1 = arith.constant 0 : index
    %c0_2 = arith.constant 0 : index
    %c0_3 = arith.constant 0 : index
    %1 = vector.load %arg2[%c0_1, %c0_2, %c0_3] : memref<1x16x256xbf16, #tpu.memory_space<vmem>>, vector<1x16x256xbf16>
    %2 = vector.shape_cast %1 : vector<1x16x256xbf16> to vector<16x256xbf16>
    %cst = arith.constant dense<0.000000e+00> : vector<8x256xf32>
    %3 = tpu.matmul %0, %2, %cst {dimension_numbers = #tpu.dot_dimension_numbers<[1], [0], [0], [1], [0, 0, 1, 1], [], []>} : vector<8x16xbf16>, vector<16x256xbf16>, vector<8x256xf32> -> vector<8x256xf32>
    %c0_4 = arith.constant 0 : index
    %c0_5 = arith.constant 0 : index
    %4 = vector.load %arg4[%c0_4, %c0_5] : memref<8x1xf32, #tpu.memory_space<vmem>>, vector<8x1xf32>
    %5 = vector.broadcast %4 : vector<8x1xf32> to vector<8x256xf32>
    %6 = arith.mulf %3, %5 : vector<8x256xf32>
    %c0_6 = arith.constant 0 : index
    %c0_7 = arith.constant 0 : index
    %7 = vector.load %arg5[%c0_6, %c0_7] : memref<8x1xf32, #tpu.memory_space<vmem>>, vector<8x1xf32>
    %8 = vector.broadcast %7 : vector<8x1xf32> to vector<8x256xf32>
    %9 = arith.addf %6, %8 : vector<8x256xf32>
    %10 = arith.negf %9 : vector<8x256xf32>
    %11 = math.exp %10 : vector<8x256xf32>
    %cst_8 = arith.constant 1.000000e+00 : f32
    %12 = vector.broadcast %cst_8 : f32 to vector<8x256xf32>
    %13 = arith.addf %12, %11 : vector<8x256xf32>
    %14 = arith.divf %12, %13 : vector<8x256xf32>
    %15 = arith.mulf %9, %14 : vector<8x256xf32>
    %c0_9 = arith.constant 0 : index
    %c0_10 = arith.constant 0 : index
    %c0_11 = arith.constant 0 : index
    %16 = vector.load %arg6[%c0_9, %c0_10, %c0_11] : memref<1x8x256xf32, #tpu.memory_space<vmem>>, vector<1x8x256xf32>
    %17 = vector.shape_cast %16 : vector<1x8x256xf32> to vector<8x256xf32>
    %18 = vector.shape_cast %15 : vector<8x256xf32> to vector<1x8x256xf32>
    tpu.vector_store %arg6[%c0_9, %c0_10, %c0_11], %18 {strides = array<i32>} : memref<1x8x256xf32, #tpu.memory_space<vmem>>, vector<1x8x256xf32>,
    return
  }
  func.func @transform_0(%arg0: i32, %arg1: i32) -> (i32, i32, i32) {
    %c0_i32 = arith.constant 0 : i32
    %c0_i32_0 = arith.constant 0 : i32
    return %arg0, %c0_i32, %arg1 : i32, i32, i32
  }
  func.func @transform_1(%arg0: i32, %arg1: i32) -> (i32, i32) {
    %c0_i32 = arith.constant 0 : i32
    %c0_i32_0 = arith.constant 0 : i32
    %c0_i32_1 = arith.constant 0 : i32
    return %c0_i32, %c0_i32_0 : i32, i32
  }
  func.func @transform_2(%arg0: i32, %arg1: i32) -> (i32, i32) {
    %c0_i32 = arith.constant 0 : i32
    %c0_i32_0 = arith.constant 0 : i32
    %c0_i32_1 = arith.constant 0 : i32
    return %c0_i32, %c0_i32_0 : i32, i32
  }
  func.func @transform_3(%arg0: i32, %arg1: i32) -> (i32, i32) {
    %c0_i32 = arith.constant 0 : i32
    %c0_i32_0 = arith.constant 0 : i32
    %c0_i32_1 = arith.constant 0 : i32
    return %c0_i32, %c0_i32_0 : i32, i32
  }
  func.func @transform_4(%arg0: i32, %arg1: i32) -> (i32, i32, i32) {
    %c0_i32 = arith.constant 0 : i32
    %c0_i32_0 = arith.constant 0 : i32
    return %arg0, %c0_i32, %arg1 : i32, i32, i32
  }
}

</mosaic_0001>

<llo_original>
// kernel: tpu_custom_call.1
$region0: #{tpu_custom_call.1}
  #allocation0 [shape = 'u32[]', space=smem, size = 0x4, offset = 0x4, fixed_abs, tag = 'smem constant byte address 0x4 - core index']
  #allocation1 [shape = 'u32[72,128]{1,0:T(1,128)}', space=vmem, size = 0x9000, scoped, tag = 'internal scratch']
  %s0 = inlined_call_operand.hbm [shape: bf16[2,16,256], index: 0, kind: input, shape index: {}]
  %s1 = inlined_call_operand.vmem [shape: bf16[8,16], index: 1, kind: input, shape index: {}]
  %s2 = inlined_call_operand.vmem [shape: f32[8,1], index: 2, kind: input, shape index: {}]
  %s3 = inlined_call_operand.vmem [shape: f32[8,1], index: 3, kind: input, shape index: {}]
  %s4 = inlined_call_operand.hbm [shape: f32[2,8,256], index: 4, kind: output, shape index: {}]
  %s5 = sld [smem:[#allocation0]]
  $region53: #{tpu_custom_call.1} parent=0
    _
  %s7 = ssub.s32 1, %s5
  %s8 = scalar_select 0, %s7, %s5
  $region1: #{tpu_custom_call.1} parent=0
    #allocation2 [shape = 'u8[16384]{0}', space=vmem, size = 0x4000, scoped, tag = 'input window, operand 0']
    #allocation3 [shape = 's32[2]{0}', space=sflag, size = 0x8, scoped, tag = 'scoped memory for tpu_custom_call.1']
    #allocation4 [shape = 's32[2]{0}', space=sflag, size = 0x8, scoped, tag = 'scoped memory for tpu_custom_call.1']
    #allocation5 [shape = 'u8[16384]{0}', space=vmem, size = 0x4000, scoped, tag = 'output window, operand 0']
    %9 = vsyncpa [#allocation3], 0
    %s10 = scalar_lea.sflag [#allocation3], 1
    %11 = vsyncpa %s10, 0
    %12 = vsyncpa [#allocation4], 0
    %s13 = scalar_lea.sflag [#allocation4], 1
    %14 = vsyncpa %s13, 0
    loop: start=0, step=1, limit=4
    $region2: #{tpu_custom_call.1} parent=1 // loop_pre_header
      _
    $region3: #{tpu_custom_call.1} parent=1 // loop_header
      %s16 = sphi 0, %s20
      %p17 = scmp.ge.s32.totalorder %s16, 4
      %s23 = sphi 0, %s35
      %s24 = sphi 0, %s31
      %s25 = sphi 0, %s23
      %s26 = sphi 0, %s24
      %s27 = sphi 0, %s25
      %s28 = sphi 0, %s26
      %s40 = sphi 0, %s42
      %s43 = sphi 0, %s40
      %s44 = sphi 0, %s43
      %s60 = sphi 0, %s44
      %s64 = sphi 0, %s64
      %s66 = sphi 0, %s64
      %s67 = sphi 0, %s66
      %s81 = sphi 0, %s67
      %s85 = sphi 0, %s85
      %s87 = sphi 0, %s85
      %s88 = sphi 0, %s87
      %s102 = sphi 0, %s88
      %s106 = sphi 0, %s106
      %s108 = sphi 0, %s106
      %s109 = sphi 0, %s108
      %s123 = sphi 0, %s109
      %s131 = sphi 0, %s133
      %s134 = sphi 0, %s131
      %s135 = sphi 0, %s134
      %s151 = sphi 0, %s135
    $region4: #{tpu_custom_call.1} parent=1 // loop_header_branch
      %19 = sbr.rel (%p17) target = $region8
    $region5: #{tpu_custom_call.1} parent=1 // loop_body
      %s21 = ssub.s32 %s16, 1
      %s22 = ssub.s32 %s16, 2
      %s29 = sadd.s32 1, %s24
      %p30 = scmp.ge.s32.totalorder %s29, 1
      %s31 = scalar_select %p30, 0, %s29
      %s32 = sadd.s32 1, %s23
      %s33 = scalar_select %p30, %s32, %s23
      %p34 = scmp.ge.s32.totalorder %s33, 2
      %s35 = scalar_select %p34, 0, %s33
      %s36 = ssub.s32 %s23, %s35
      %s37 = ssub.s32 %s24, %s31
      %s38 = sor.u32 %s36, %s37
      %p39 = scmp.eq.s32.totalorder %s38, 0
      %s41 = sadd.s32 %s40, 1
      %s42 = scalar_select %p39, %s40, %s41
      %p45 = pneg %p39
      %p46 = scmp.eq.s32.totalorder %s16, 1
      %p47 = por %p45, %p46
      %p48 = scmp.ne.s32.totalorder %s40, %s43
      %p49 = scmp.eq.s32.totalorder %s16, 0
      %p50 = por %p48, %p49
      %p51 = scmp.ne.s32.totalorder %s40, %s43
      %p52 = scmp.eq.s32.totalorder %s21, 1
      %p53 = por %p51, %p52
      %p54 = scmp.ne.s32.totalorder %s43, %s44
      %p55 = scmp.eq.s32.totalorder %s21, 0
      %p56 = por %p54, %p55
      %p57 = scmp.ne.s32.totalorder %s43, %s44
      %p58 = scmp.eq.s32.totalorder %s22, 1
      %p59 = por %p57, %p58
      %p61 = scmp.ne.s32.totalorder %s44, %s60
      %p62 = scmp.eq.s32.totalorder %s22, 0
      %p63 = por %p61, %p62
      %s65 = sadd.s32 %s64, 1
      %p68 = scmp.eq.s32.totalorder %s16, 1
      %p69 = scmp.ne.s32.totalorder %s64, %s66
      %p70 = scmp.eq.s32.totalorder %s16, 0
      %p71 = por %p69, %p70
      %p72 = scmp.ne.s32.totalorder %s64, %s66
      %p73 = scmp.eq.s32.totalorder %s21, 1
      %p74 = por %p72, %p73
      %p75 = scmp.ne.s32.totalorder %s66, %s67
      %p76 = scmp.eq.s32.totalorder %s21, 0
      %p77 = por %p75, %p76
      %p78 = scmp.ne.s32.totalorder %s66, %s67
      %p79 = scmp.eq.s32.totalorder %s22, 1
      %p80 = por %p78, %p79
      %p82 = scmp.ne.s32.totalorder %s67, %s81
      %p83 = scmp.eq.s32.totalorder %s22, 0
      %p84 = por %p82, %p83
      %s86 = sadd.s32 %s85, 1
      %p89 = scmp.eq.s32.totalorder %s16, 1
      %p90 = scmp.ne.s32.totalorder %s85, %s87
      %p91 = scmp.eq.s32.totalorder %s16, 0
      %p92 = por %p90, %p91
      %p93 = scmp.ne.s32.totalorder %s85, %s87
      %p94 = scmp.eq.s32.totalorder %s21, 1
      %p95 = por %p93, %p94
      %p96 = scmp.ne.s32.totalorder %s87, %s88
      %p97 = scmp.eq.s32.totalorder %s21, 0
      %p98 = por %p96, %p97
      %p99 = scmp.ne.s32.totalorder %s87, %s88
      %p100 = scmp.eq.s32.totalorder %s22, 1
      %p101 = por %p99, %p100
      %p103 = scmp.ne.s32.totalorder %s88, %s102
      %p104 = scmp.eq.s32.totalorder %s22, 0
      %p105 = por %p103, %p104
      %s107 = sadd.s32 %s106, 1
      %p110 = scmp.eq.s32.totalorder %s16, 1
      %p111 = scmp.ne.s32.totalorder %s106, %s108
      %p112 = scmp.eq.s32.totalorder %s16, 0
      %p113 = por %p111, %p112
      %p114 = scmp.ne.s32.totalorder %s106, %s108
      %p115 = scmp.eq.s32.totalorder %s21, 1
      %p116 = por %p114, %p115
      %p117 = scmp.ne.s32.totalorder %s108, %s109
      %p118 = scmp.eq.s32.totalorder %s21, 0
      %p119 = por %p117, %p118
      %p120 = scmp.ne.s32.totalorder %s108, %s109
      %p121 = scmp.eq.s32.totalorder %s22, 1
      %p122 = por %p120, %p121
      %p124 = scmp.ne.s32.totalorder %s109, %s123
      %p125 = scmp.eq.s32.totalorder %s22, 0
      %p126 = por %p124, %p125
      %s127 = ssub.s32 %s23, %s35
      %s128 = ssub.s32 %s24, %s31
      %s129 = sor.u32 %s127, %s128
      %p130 = scmp.eq.s32.totalorder %s129, 0
      %s132 = sadd.s32 %s131, 1
      %s133 = scalar_select %p130, %s131, %s132
      %p136 = pneg %p130
      %p137 = scmp.eq.s32.totalorder %s16, 1
      %p138 = por %p136, %p137
      %p139 = scmp.ne.s32.totalorder %s131, %s134
      %p140 = scmp.eq.s32.totalorder %s16, 0
      %p141 = por %p139, %p140
      %p142 = scmp.ne.s32.totalorder %s131, %s134
      %p143 = scmp.eq.s32.totalorder %s21, 1
      %p144 = por %p142, %p143
      %p145 = scmp.ne.s32.totalorder %s134, %s135
      %p146 = scmp.eq.s32.totalorder %s21, 0
      %p147 = por %p145, %p146
      %p148 = scmp.ne.s32.totalorder %s134, %s135
      %p149 = scmp.eq.s32.totalorder %s22, 1
      %p150 = por %p148, %p149
      %p152 = scmp.ne.s32.totalorder %s135, %s151
      %p153 = scmp.eq.s32.totalorder %s22, 0
      %p154 = por %p152, %p153
      %p155 = scmp.le.s32.totalorder 1, %s16
      %p156 = scmp.lt.s32.totalorder %s16, 3
      %p157 = pnand %p155, %p156
      %p158 = pneg %p157
      // Predicated region
      $region9: #{tpu_custom_call.1} parent=5 // pred_check
        _
      $region10: #{tpu_custom_call.1} parent=5 // pred_check_branch
        %160 = sbr.rel (%p157) target = $region12
      $region11: #{tpu_custom_call.1} parent=5 // pred_region
        %s161 = ssub.s32 %s16, 1
        // Predicated region
        $region13: #{tpu_custom_call.1} parent=11 // pred_check
          %p162 = pneg %p77
        $region14: #{tpu_custom_call.1} parent=11 // pred_check_branch
          %164 = sbr.rel (%p162) target = $region16
        $region15: #{tpu_custom_call.1} parent=11 // pred_region
          _
        $region16: #{tpu_custom_call.1} parent=11 // pred_fallthru
          _
        // Predicated region
        $region17: #{tpu_custom_call.1} parent=11 // pred_check
          %p165 = pneg %p98
        $region18: #{tpu_custom_call.1} parent=11 // pred_check_branch
          %167 = sbr.rel (%p165) target = $region20
        $region19: #{tpu_custom_call.1} parent=11 // pred_region
          _
        $region20: #{tpu_custom_call.1} parent=11 // pred_fallthru
          _
        // Predicated region
        $region21: #{tpu_custom_call.1} parent=11 // pred_check
          %p168 = pneg %p119
        $region22: #{tpu_custom_call.1} parent=11 // pred_check_branch
          %170 = sbr.rel (%p168) target = $region24
        $region23: #{tpu_custom_call.1} parent=11 // pred_region
          _
        $region24: #{tpu_custom_call.1} parent=11 // pred_fallthru
          _
      $region12: #{tpu_custom_call.1} parent=5 // pred_fallthru
        _
      %p171 = scmp.lt.s32.totalorder %s16, 2
      // Predicated region
      $region25: #{tpu_custom_call.1} parent=5 // pred_check
        %p172 = pneg %p171
      $region26: #{tpu_custom_call.1} parent=5 // pred_check_branch
        %174 = sbr.rel (%p172) target = $region28
      $region27: #{tpu_custom_call.1} parent=5 // pred_region
        // Predicated region
        $region29: #{tpu_custom_call.1} parent=27 // pred_check
          %p175 = pneg %p50
        $region30: #{tpu_custom_call.1} parent=27 // pred_check_branch
          %177 = sbr.rel (%p175) target = $region32
        $region31: #{tpu_custom_call.1} parent=27 // pred_region
          %s178 = sand.u32 %s40, 1
          %s179 = scalar_lea.sflag [#allocation3], %s178
          %s180 = sand.u32 %s40, 1
          %s181 = smul.addr %s180, 16
          %s182 = scalar_lea.vmem [#allocation2], %s181
          %s183 = smul.u32 2, %s24
          %185 = vsyncadd %s179, 0
          %s186 = smul.addr %s23, 4
          %s187 = sadd.s32 %s183, %s186
          %s188 = smul.addr %s187, 4
          %s189 = scalar_lea.hbm %s0, %s188
          %s190 = sshll.u32 %s189, 4
          %s191 = int_to_ptr.hbm [resolvable:$true] %s190
          %s192 = sshll.u32 %s182, 4
          %s193 = int_to_ptr.vmem [resolvable:$true] %s192
          %198 = dma.hbm_to_vmem [thread:$0]  %s191, 256, %s193, %s179, 128, 128, 8
        $region32: #{tpu_custom_call.1} parent=27 // pred_fallthru
          _
      $region28: #{tpu_custom_call.1} parent=5 // pred_fallthru
        _
      %p199 = scmp.le.s32.totalorder 1, %s16
      %p200 = scmp.lt.s32.totalorder %s16, 3
      %p201 = pnand %p199, %p200
      %p202 = pneg %p201
      // Predicated region
      $region33: #{tpu_custom_call.1} parent=5 // pred_check
        _
      $region34: #{tpu_custom_call.1} parent=5 // pred_check_branch
        %204 = sbr.rel (%p201) target = $region36
      $region35: #{tpu_custom_call.1} parent=5 // pred_region
        %s205 = ssub.s32 %s16, 1
        %s206 = sand.u32 %s43, 1
        %s207 = scalar_lea.sflag [#allocation3], %s206
        %s208 = sand.u32 %s43, 1
        %s209 = smul.addr %s208, 16
        %s210 = scalar_lea.vmem [#allocation2], %s209
        // Predicated region
        $region37: #{tpu_custom_call.1} parent=35 // pred_check
          %p211 = pneg %p56
        $region38: #{tpu_custom_call.1} parent=35 // pred_check_branch
          %213 = sbr.rel (%p211) target = $region40
        $region39: #{tpu_custom_call.1} parent=35 // pred_region
          %215 = dma.done %s207, 256
        $region40: #{tpu_custom_call.1} parent=35 // pred_fallthru
          _
        %s216 = sand.u32 %s43, 1
        %s217 = scalar_lea.sflag [#allocation3], %s216
        %s218 = sand.u32 %s43, 1
        %s219 = smul.addr %s218, 16
        %s220 = scalar_lea.vmem [#allocation2], %s219
        %p221 = pneg %p56
        %p222 = pneg %p53
        %p223 = pneg %p77
        %p224 = pneg %p74
        %p225 = pneg %p98
        %p226 = pneg %p95
        %p227 = pneg %p119
        %p228 = pneg %p116
        %p229 = pneg %p147
        %p230 = pneg %p144
        %s231 = sand.u32 %s134, 1
        %s232 = scalar_lea.sflag [#allocation4], %s231
        %s233 = sand.u32 %s134, 1
        %s234 = smul.addr %s233, 16
        %s235 = scalar_lea.vmem [#allocation5], %s234
        %s236 = smul.u32 2, %s26
        %s237 = smul.u32 2, %s26
        %v239 = vld [vmem:[%s1] sm:$0xf]
        %v240 = vld [vmem:[%s210] sm:$0xff]
        %v241 = vld [vmem:[%s210 + $0x8] sm:$0xff]
        %v244 = vunpack.c.l.b16 %v240
        %v245 = vunpack.c.h.b16 %v240
        %v246 = vunpack.c.l.b16 %v241
        %v247 = vunpack.c.h.b16 %v241
        %v248 = vpack.c.b16 %v246, %v244
        %v249 = vpack.c.b16 %v247, %v245
        %vm252 = vcmask 130048
        %v254 = vsel %vm252, %v239, 0
        %256 = vmatpush.bf16.msra.mxu0 0
        %257 = vmatpush.bf16.msra.mxu0 0
        %258 = vmatpush.bf16.msra.mxu0 0
        %259 = vmatpush.bf16.msra.mxu0 0
        %260 = vmatpush.bf16.msra.mxu0 0
        %261 = vmatpush.bf16.msra.mxu0 0
        %262 = vmatpush.bf16.msra.mxu0 0
        %263 = vmatpush.bf16.msra.mxu0 %v248
        %264 = vmatmul.bf16.gmra.mxu0 %v254
        %v265 = vpop.f32.mrf.mxu0
        %v266 = vadd.f32 0.0, %v265
        %v267 = vpop.f32.mrf.mxu0
        %268 = vdwg.mxu0
        %269 = vmatpush.bf16.msra.mxu0 0
        %270 = vmatpush.bf16.msra.mxu0 0
        %271 = vmatpush.bf16.msra.mxu0 0
        %272 = vmatpush.bf16.msra.mxu0 0
        %273 = vmatpush.bf16.msra.mxu0 0
        %274 = vmatpush.bf16.msra.mxu0 0
        %275 = vmatpush.bf16.msra.mxu0 0
        %276 = vmatpush.bf16.msra.mxu0 %v249
        %277 = vmatmul.bf16.gmra.mxu0 %v254
        %v278 = vpop.f32.mrf.mxu0
        %v279 = vadd.f32 0.0, %v278
        %v280 = vpop.f32.mrf.mxu0
        %281 = vdwg.mxu0
        %v282 = vld [vmem:[%s2] sm:$0xff]
        %284 = vset.pattern.permute.xlu0 0
        %285 = vperm.xlu0 %284, %v282
        %v286 = vpop.permute.xlu0 %285
        %v288 = vmul.f32 %v266, %v286
        %v289 = vmul.f32 %v279, %v286
        %v290 = vld [vmem:[%s3] sm:$0xff]
        %292 = vset.pattern.permute.xlu0 0
        %293 = vperm.xlu0 %292, %v290
        %v294 = vpop.permute.xlu0 %293
        %v296 = vadd.f32 %v288, %v294
        %v297 = vadd.f32 %v289, %v294
        %v298 = vxor.u32 %v296, 2147483648
        %v299 = vxor.u32 %v297, 2147483648
        %v300 = vmul.f32 %v298, 1.442695
        %v301 = vpow.pop %v300
        %v302 = vmul.f32 %v299, 1.442695
        %v303 = vpow.pop %v302
        %v304 = vadd.f32 %v301, 1.0
        %v305 = vadd.f32 %v303, 1.0
        %v306 = vrcp.pop %v304
        %v307 = vmul.f32 %v304, %v306
        %v308 = vsub.f32 1.0, %v307
        %v309 = vmul.f32 %v306, %v308
        %v310 = vadd.f32 %v306, %v309
        %vm311 = vweird.f32 %v304
        %vm312 = vweird.f32 %v306
        %vm313 = vmor %vm311, %vm312
        %v314 = vsel %vm313, %v306, %v310
        %v315 = vand.u32 2147483647, %v304
        %vm316 = vcmp.eq.f32.partialorder %v315, 8.507059e+37
        %v317 = vand.u32 %v304, 2147483648
        %v318 = vor.u32 1.1754944e-38, %v317
        %v319 = vsel %vm316, %v318, %v314
        %v320 = vmul.f32 1.0, %v319
        %v321 = vrcp.pop %v305
        %v322 = vmul.f32 %v305, %v321
        %v323 = vsub.f32 1.0, %v322
        %v324 = vmul.f32 %v321, %v323
        %v325 = vadd.f32 %v321, %v324
        %vm326 = vweird.f32 %v305
        %vm327 = vweird.f32 %v321
        %vm328 = vmor %vm326, %vm327
        %v329 = vsel %vm328, %v321, %v325
        %v330 = vand.u32 2147483647, %v305
        %vm331 = vcmp.eq.f32.partialorder %v330, 8.507059e+37
        %v332 = vand.u32 %v305, 2147483648
        %v333 = vor.u32 1.1754944e-38, %v332
        %v334 = vsel %vm331, %v333, %v329
        %v335 = vmul.f32 1.0, %v334
        %v336 = vmul.f32 %v296, %v320
        %v337 = vmul.f32 %v297, %v335
        %338 = vst [vmem:[%s235] sm:$0xff] %v336
        %339 = vst [vmem:[%s235 + $0x8] sm:$0xff] %v337
        %s340 = sand.u32 %s134, 1
        %s341 = scalar_lea.sflag [#allocation4], %s340
        %s342 = sand.u32 %s134, 1
        %s343 = smul.addr %s342, 16
        %s344 = scalar_lea.vmem [#allocation5], %s343
        // Predicated region
        $region41: #{tpu_custom_call.1} parent=35 // pred_check
          %p345 = pneg %p144
        $region42: #{tpu_custom_call.1} parent=35 // pred_check_branch
          %347 = sbr.rel (%p345) target = $region44
        $region43: #{tpu_custom_call.1} parent=35 // pred_region
          %s348 = smul.u32 2, %s26
          %350 = vsyncadd %s341, 0
          %s351 = smul.addr %s25, 2
          %s352 = sadd.s32 %s348, %s351
          %s353 = smul.addr %s352, 8
          %s354 = scalar_lea.hbm %s4, %s353
          %s356 = sshll.u32 %s344, 4
          %s357 = int_to_ptr.vmem [resolvable:$true] %s356
          %s358 = sshll.u32 %s354, 4
          %s359 = int_to_ptr.hbm [resolvable:$true] %s358
          %361 = dma.vmem_to_hbm [thread:$0]  %s357, 256, %s359, %s341
        $region44: #{tpu_custom_call.1} parent=35 // pred_fallthru
          _
      $region36: #{tpu_custom_call.1} parent=5 // pred_fallthru
        _
      %p362 = scmp.le.s32.totalorder 2, %s16
      // Predicated region
      $region45: #{tpu_custom_call.1} parent=5 // pred_check
        %p363 = pneg %p362
      $region46: #{tpu_custom_call.1} parent=5 // pred_check_branch
        %365 = sbr.rel (%p363) target = $region48
      $region47: #{tpu_custom_call.1} parent=5 // pred_region
        %s366 = ssub.s32 %s16, 2
        // Predicated region
        $region49: #{tpu_custom_call.1} parent=47 // pred_check
          %p367 = pneg %p150
        $region50: #{tpu_custom_call.1} parent=47 // pred_check_branch
          %369 = sbr.rel (%p367) target = $region52
        $region51: #{tpu_custom_call.1} parent=47 // pred_region
          %s370 = sand.u32 %s135, 1
          %s371 = scalar_lea.sflag [#allocation4], %s370
          %s372 = sand.u32 %s135, 1
          %s373 = smul.addr %s372, 16
          %s374 = scalar_lea.vmem [#allocation5], %s373
          %376 = dma.done %s371, 256
        $region52: #{tpu_custom_call.1} parent=47 // pred_fallthru
          _
      $region48: #{tpu_custom_call.1} parent=5 // pred_fallthru
        _
    $region6: #{tpu_custom_call.1} parent=1 // loop_footer
      %s20 = sadd.s32 1, %s16
    $region7: #{tpu_custom_call.1} parent=1 // loop_footer_branch
      %15 = sbr.rel target = $region3
    $region8: #{tpu_custom_call.1} parent=1 // loop_exit
      _
    %377 = vsyncpa [#allocation3], 1
    %s378 = scalar_lea.sflag [#allocation3], 1
    %379 = vsyncpa %s378, 1
    %380 = vsyncpa [#allocation4], 1
    %s381 = scalar_lea.sflag [#allocation4], 1
    %382 = vsyncpa %s381, 1

</llo_original>
